<compile_context>
chip_gen: v7x
topology: tpu7x:2x2x1
jax: 0.10.0
libtpu: 0.0.40
codegen_flags: <defaults>
</compile_context>

<pallas_src>
import numpy as np
import jax
import jax.numpy as jnp
from jax.experimental import pallas as pl
from jax.experimental.pallas import tpu as pltpu

CNNL_DIM_MAX = 8


# ----------------------------------------------------------------------------
# Deterministic re-implementation of the module's parameter generators
# (identical np.random consumption order to the PyTorch reference, operating
# on shape tuples instead of tensors).
# ----------------------------------------------------------------------------
def get_expand_parameter(shape, axis_num):
    tensor_dim = len(shape)
    if tensor_dim + axis_num >= CNNL_DIM_MAX:
        axis_num = CNNL_DIM_MAX - tensor_dim
    expand_parameter = list(shape)
    max_dim_value = max(expand_parameter) + 2
    expand_dim_num = 0
    for i in range(tensor_dim):
        if expand_parameter[i] == 1:
            expand_parameter[i] = int(np.random.randint(1, max_dim_value))
            expand_dim_num += 1
    while expand_dim_num < axis_num:
        expand_parameter.insert(0, expand_dim_num + 1)
        expand_dim_num += 1
    return expand_parameter


def get_permute_parameter(shape):
    dim_vec = np.arange(len(shape))
    np.random.shuffle(dim_vec)
    return [int(d) for d in dim_vec]


def get_select_parameter(shape):
    tensor_size = list(shape)
    dim_value = 1
    flag = 0
    if len(tensor_size) == 0:
        return (0, 0)
    dim = int(np.random.randint(0, len(tensor_size)))
    while dim_value <= 1 and flag < len(tensor_size):
        dim = 0 if dim == len(tensor_size) - 1 else dim + 1
        dim_value = tensor_size[dim]
        flag += 1
    if dim_value == 1:
        return (0, 0)
    index = int(np.random.randint(1, dim_value))
    return (dim, index)


# ----------------------------------------------------------------------------
# Fused Pallas kernel: out_tile = broadcast(z_tile) + 1, gridded over the
# FINAL output.  z has the same rank as the output with size-1 broadcast axes.
# ----------------------------------------------------------------------------
def _bcast_add_one_kernel(z_ref, o_ref):
    one = jnp.asarray(1, o_ref.dtype)
    o_ref[...] = jnp.broadcast_to(z_ref[...], o_ref.shape) + one


_TM_MAX = 512    # second-to-last tile cap (multiple of 8)
_TN_MAX = 1024   # last-dim tile cap (multiple of 128); 512x1024 f32 = 2 MiB/block


def _fused_bcast_add_one(z, out_shape):
    """out = broadcast_to(z, out_shape) + 1, writing the final output exactly once."""
    O = tuple(int(d) for d in out_shape)
    r = len(O)
    assert r >= 2 and z.ndim == r, (z.shape, O)

    # Last-two-dim tiles: full extent when small, else 8/128-multiple caps
    # (ragged final blocks are legal because the tile dims stay 8/128-aligned).
    tm = O[-2] if O[-2] <= _TM_MAX else _TM_MAX
    tn = O[-1] if O[-1] <= _TN_MAX else _TN_MAX

    # One grid axis per leading output dim (block 1) + tiled last two dims.
    grid = tuple(O[:-2]) + (pl.cdiv(O[-2], tm), pl.cdiv(O[-1], tn))
    block_out = (1,) * (r - 2) + (tm, tn)

    zs = tuple(int(d) for d in z.shape)
    real = tuple(zs[j] == O[j] for j in range(r))          # non-broadcast axes
    block_z = tuple(block_out[j] if real[j] else 1 for j in range(r))

    def out_map(*i):
        return i

    def z_map(*i):
        return tuple(i[j] if real[j] else 0 for j in range(r))

    n_out = int(np.prod(O))
    itemsize = int(np.dtype(z.dtype).itemsize)

    return pl.pallas_call(
        _bcast_add_one_kernel,
        out_shape=jax.ShapeDtypeStruct(O, z.dtype),
        grid=grid,
        in_specs=[pl.BlockSpec(block_z, z_map)],
        out_specs=pl.BlockSpec(block_out, out_map),
        compiler_params=pltpu.CompilerParams(
            dimension_semantics=("parallel",) * len(grid)),
        cost_estimate=pl.CostEstimate(
            flops=n_out, transcendentals=0,
            bytes_accessed=2 * n_out * itemsize),
    )(z)


# ----------------------------------------------------------------------------
# ViewChain2 forward: select commuted ahead; expand/permute folded into the
# fused kernel's grid / BlockSpec index maps; +1 fused into the final write.
# ----------------------------------------------------------------------------
def view_chain2_forward(x):
    n = x.ndim
    S = tuple(int(s) for s in x.shape)
    axis_num = int(np.random.randint(0, 2))
    E = tuple(int(e) for e in get_expand_parameter(S, axis_num))
    m = len(E)
    lead = m - n                                   # inserted leading broadcast dims
    P = tuple(get_permute_parameter(E))
    permuted_shape = tuple(E[p] for p in P)
    dim, index = get_select_parameter(permuted_shape)

    if m == 0:                                     # 0-d input: reference skips select
        return _fused_bcast_add_one(x.reshape(1, 1), (1, 1)).reshape(())

    # ---- commute the select in front of the expand/permute (exact) ----------
    a_sel = P[dim]                                 # expanded axis hit by select
    if a_sel >= lead:
        t_sel = a_sel - lead                       # original axis of x
        if S[t_sel] > 1:
            x_sel = x[(slice(None),) * t_sel + (int(index),)]
        else:
            x_sel = jnp.squeeze(x, axis=t_sel)     # broadcast axis: any index == elem 0
        removed = t_sel
    else:
        x_sel = x                                  # select hits an inserted broadcast axis
        removed = None

    kept = [P[k] for k in range(m) if k != dim]    # expanded axes, in output order
    O = tuple(E[a] for a in kept)                  # final output shape
    r = len(O)
    axis_to_out = {a: j for j, a in enumerate(kept)}

    # Surviving original axes (in x_sel order) and their output positions.
    surv = [t for t in range(n) if t != removed]
    out_pos = [axis_to_out[lead + t] for t in surv]

    # Relay the SMALL source into final-output axis order (tiny XLA op), then
    # embed it into a rank-r shape with 1s at broadcast axes.
    order = sorted(range(len(surv)), key=lambda k: out_pos[k])
    xt = jnp.transpose(x_sel, order)
    z_shape = [1] * r
    for k in order:
        z_shape[out_pos[k]] = S[surv[k]]
    z = xt.reshape(z_shape)

    if r >= 2:
        return _fused_bcast_add_one(z, O)

    # Rank-0/1 outputs (not hit for rank-4 inputs): tiny; run the same kernel
    # on a 2-D view.
    ntot = max(1, int(np.prod(O)))
    zb = jnp.broadcast_to(z, O).reshape(1, ntot)
    return _fused_bcast_add_one(zb, (1, ntot)).reshape(O)


if __name__ == "__main__":
    # Deterministic view-chain parameters + deterministic input.
    np.random.seed(0)
    key = jax.random.PRNGKey(0)
    x = jax.random.normal(key, (2, 4, 16, 16), dtype=jnp.float32)

    y = view_chain2_forward(x)
    y = jax.block_until_ready(y)

    # Plain-JAX reference of the exact same chain (same seed, same RNG order).
    np.random.seed(0)
    axis_num = int(np.random.randint(0, 2))
    v_expand = get_expand_parameter(x.shape, axis_num)
    ref = jnp.broadcast_to(x, tuple(int(e) for e in v_expand))
    v_permute = get_permute_parameter(ref.shape)
    ref = jnp.transpose(ref, tuple(int(p) for p in v_permute))
    dim, index = get_select_parameter(ref.shape)
    if ref.ndim != 0:
        ref = ref[(slice(None),) * int(dim) + (int(index),)]
    ref = ref + 1.0

    assert y.shape == ref.shape, (y.shape, ref.shape)
    np.testing.assert_allclose(np.asarray(y), np.asarray(ref), rtol=1e-6, atol=1e-6)

    print("KERNEL_OK")
</pallas_src>

<mosaic_0001>
module attributes {stable_mosaic.version = 11 : i64} {
  func.func @_bcast_add_one_kernel(%arg0: i32, %arg1: i32, %arg2: i32, %arg3: memref<1x4x16xf32, #tpu.memory_space<vmem>>, %arg4: memref<1x4x16xf32, #tpu.memory_space<vmem>>) attributes {dimension_semantics = [#tpu.dimension_semantics<parallel>, #tpu.dimension_semantics<parallel>, #tpu.dimension_semantics<parallel>], iteration_bounds = array<i64: 2, 1, 1>, scalar_prefetch = 0 : i64, scratch_operands = 0 : i64, tpu.core_type = #tpu.core_type<tc>, window_params = [{transform_indices = @transform_0, window_bounds = array<i64: 1, 4, 16>}, {transform_indices = @transform_1, window_bounds = array<i64: 1, 4, 16>}]} {
    %c0 = arith.constant 0 : index
    %c0_0 = arith.constant 0 : index
    %c0_1 = arith.constant 0 : index
    %0 = vector.load %arg3[%c0, %c0_0, %c0_1] : memref<1x4x16xf32, #tpu.memory_space<vmem>>, vector<1x4x16xf32>
    %cst = arith.constant 1.000000e+00 : f32
    %1 = vector.broadcast %cst : f32 to vector<1x4x16xf32>
    %2 = arith.addf %0, %1 : vector<1x4x16xf32>
    %c0_2 = arith.constant 0 : index
    %c0_3 = arith.constant 0 : index
    %c0_4 = arith.constant 0 : index
    %3 = vector.load %arg4[%c0_2, %c0_3, %c0_4] : memref<1x4x16xf32, #tpu.memory_space<vmem>>, vector<1x4x16xf32>
    tpu.vector_store %arg4[%c0_2, %c0_3, %c0_4], %2 {strides = array<i32>} : memref<1x4x16xf32, #tpu.memory_space<vmem>>, vector<1x4x16xf32>,
    return
  }
  func.func @transform_0(%arg0: i32, %arg1: i32, %arg2: i32) -> (i32, i32, i32) {
    %c0_i32 = arith.constant 0 : i32
    return %arg0, %arg1, %arg2 : i32, i32, i32
  }
  func.func @transform_1(%arg0: i32, %arg1: i32, %arg2: i32) -> (i32, i32, i32) {
    %c0_i32 = arith.constant 0 : i32
    return %arg0, %arg1, %arg2 : i32, i32, i32
  }
}

</mosaic_0001>

<llo_original>
// kernel: tpu_custom_call.1
$region0: #{tpu_custom_call.1}
  #allocation0 [shape = 'u32[]', space=smem, size = 0x4, offset = 0x4, fixed_abs, tag = 'smem constant byte address 0x4 - core index']
  #allocation1 [shape = 'u32[144,128]{1,0:T(1,128)}', space=vmem, size = 0x12000, scoped, tag = 'internal scratch']
  %s0 = inlined_call_operand.hbm [shape: f32[2,4,16], index: 0, kind: input, shape index: {}]
  %s1 = inlined_call_operand.hbm [shape: f32[2,4,16], index: 1, kind: output, shape index: {}]
  %s2 = sld [smem:[#allocation0]]
  $region41: #{tpu_custom_call.1} parent=0
    _
  %s4 = ssub.s32 1, %s2
  %s5 = scalar_select 0, %s4, %s2
  $region1: #{tpu_custom_call.1} parent=0
    #allocation2 [shape = 'u8[4096]{0}', space=vmem, size = 0x1000, scoped, tag = 'input window, operand 0']
    #allocation3 [shape = 's32[2]{0}', space=sflag, size = 0x8, scoped, tag = 'scoped memory for tpu_custom_call.1']
    #allocation4 [shape = 's32[2]{0}', space=sflag, size = 0x8, scoped, tag = 'scoped memory for tpu_custom_call.1']
    #allocation5 [shape = 'u8[4096]{0}', space=vmem, size = 0x1000, scoped, tag = 'output window, operand 0']
    %6 = vsyncpa [#allocation3], 0
    %s7 = scalar_lea.sflag [#allocation3], 1
    %8 = vsyncpa %s7, 0
    %9 = vsyncpa [#allocation4], 0
    %s10 = scalar_lea.sflag [#allocation4], 1
    %11 = vsyncpa %s10, 0
    loop: start=0, step=1, limit=4
    $region2: #{tpu_custom_call.1} parent=1 // loop_pre_header
      _
    $region3: #{tpu_custom_call.1} parent=1 // loop_header
      %s13 = sphi 0, %s17
      %p14 = scmp.ge.s32.totalorder %s13, 4
      %s20 = sphi 0, %s39
      %s21 = sphi 0, %s35
      %s22 = sphi 0, %s31
      %s23 = sphi 0, %s20
      %s24 = sphi 0, %s21
      %s25 = sphi 0, %s22
      %s26 = sphi 0, %s23
      %s27 = sphi 0, %s24
      %s28 = sphi 0, %s25
      %s46 = sphi 0, %s48
      %s49 = sphi 0, %s46
      %s50 = sphi 0, %s49
      %s66 = sphi 0, %s50
      %s76 = sphi 0, %s78
      %s79 = sphi 0, %s76
      %s80 = sphi 0, %s79
      %s96 = sphi 0, %s80
    $region4: #{tpu_custom_call.1} parent=1 // loop_header_branch
      %16 = sbr.rel (%p14) target = $region8
    $region5: #{tpu_custom_call.1} parent=1 // loop_body
      %s18 = ssub.s32 %s13, 1
      %s19 = ssub.s32 %s13, 2
      %s29 = sadd.s32 1, %s22
      %p30 = scmp.ge.s32.totalorder %s29, 1
      %s31 = scalar_select %p30, 0, %s29
      %s32 = sadd.s32 1, %s21
      %s33 = scalar_select %p30, %s32, %s21
      %p34 = scmp.ge.s32.totalorder %s33, 1
      %s35 = scalar_select %p34, 0, %s33
      %s36 = sadd.s32 1, %s20
      %s37 = scalar_select %p34, %s36, %s20
      %p38 = scmp.ge.s32.totalorder %s37, 2
      %s39 = scalar_select %p38, 0, %s37
      %s40 = ssub.s32 %s20, %s39
      %s41 = ssub.s32 %s21, %s35
      %s42 = sor.u32 %s40, %s41
      %s43 = ssub.s32 %s22, %s31
      %s44 = sor.u32 %s42, %s43
      %p45 = scmp.eq.s32.totalorder %s44, 0
      %s47 = sadd.s32 %s46, 1
      %s48 = scalar_select %p45, %s46, %s47
      %p51 = pneg %p45
      %p52 = scmp.eq.s32.totalorder %s13, 1
      %p53 = por %p51, %p52
      %p54 = scmp.ne.s32.totalorder %s46, %s49
      %p55 = scmp.eq.s32.totalorder %s13, 0
      %p56 = por %p54, %p55
      %p57 = scmp.ne.s32.totalorder %s46, %s49
      %p58 = scmp.eq.s32.totalorder %s18, 1
      %p59 = por %p57, %p58
      %p60 = scmp.ne.s32.totalorder %s49, %s50
      %p61 = scmp.eq.s32.totalorder %s18, 0
      %p62 = por %p60, %p61
      %p63 = scmp.ne.s32.totalorder %s49, %s50
      %p64 = scmp.eq.s32.totalorder %s19, 1
      %p65 = por %p63, %p64
      %p67 = scmp.ne.s32.totalorder %s50, %s66
      %p68 = scmp.eq.s32.totalorder %s19, 0
      %p69 = por %p67, %p68
      %s70 = ssub.s32 %s20, %s39
      %s71 = ssub.s32 %s21, %s35
      %s72 = sor.u32 %s70, %s71
      %s73 = ssub.s32 %s22, %s31
      %s74 = sor.u32 %s72, %s73
      %p75 = scmp.eq.s32.totalorder %s74, 0
      %s77 = sadd.s32 %s76, 1
      %s78 = scalar_select %p75, %s76, %s77
      %p81 = pneg %p75
      %p82 = scmp.eq.s32.totalorder %s13, 1
      %p83 = por %p81, %p82
      %p84 = scmp.ne.s32.totalorder %s76, %s79
      %p85 = scmp.eq.s32.totalorder %s13, 0
      %p86 = por %p84, %p85
      %p87 = scmp.ne.s32.totalorder %s76, %s79
      %p88 = scmp.eq.s32.totalorder %s18, 1
      %p89 = por %p87, %p88
      %p90 = scmp.ne.s32.totalorder %s79, %s80
      %p91 = scmp.eq.s32.totalorder %s18, 0
      %p92 = por %p90, %p91
      %p93 = scmp.ne.s32.totalorder %s79, %s80
      %p94 = scmp.eq.s32.totalorder %s19, 1
      %p95 = por %p93, %p94
      %p97 = scmp.ne.s32.totalorder %s80, %s96
      %p98 = scmp.eq.s32.totalorder %s19, 0
      %p99 = por %p97, %p98
      %p100 = scmp.le.s32.totalorder 1, %s13
      %p101 = scmp.lt.s32.totalorder %s13, 3
      %p102 = pnand %p100, %p101
      %p103 = pneg %p102
      // Predicated region
      $region9: #{tpu_custom_call.1} parent=5 // pred_check
        _
      $region10: #{tpu_custom_call.1} parent=5 // pred_check_branch
        %105 = sbr.rel (%p102) target = $region12
      $region11: #{tpu_custom_call.1} parent=5 // pred_region
        %s106 = ssub.s32 %s13, 1
      $region12: #{tpu_custom_call.1} parent=5 // pred_fallthru
        _
      %p107 = scmp.lt.s32.totalorder %s13, 2
      // Predicated region
      $region13: #{tpu_custom_call.1} parent=5 // pred_check
        %p108 = pneg %p107
      $region14: #{tpu_custom_call.1} parent=5 // pred_check_branch
        %110 = sbr.rel (%p108) target = $region16
      $region15: #{tpu_custom_call.1} parent=5 // pred_region
        // Predicated region
        $region17: #{tpu_custom_call.1} parent=15 // pred_check
          %p111 = pneg %p56
        $region18: #{tpu_custom_call.1} parent=15 // pred_check_branch
          %113 = sbr.rel (%p111) target = $region20
        $region19: #{tpu_custom_call.1} parent=15 // pred_region
          %s114 = sand.u32 %s46, 1
          %s115 = scalar_lea.sflag [#allocation3], %s114
          %s116 = sand.u32 %s46, 1
          %s117 = smul.addr %s116, 4
          %s118 = scalar_lea.vmem [#allocation2], %s117
          %s120 = ssub.s32 64, 64
          %121 = vsyncadd %s115, %s120
          %s122 = sadd.s32 %s22, %s21
          %s123 = sadd.s32 %s122, %s20
          %s124 = smul.addr %s123, 64
          %s125 = scalar_lea.hbm %s0, %s124
          %s127 = sshll.u32 %s118, 4
          %s128 = int_to_ptr.vmem [resolvable:$true] %s127
          %130 = dma.hbm_to_vmem [thread:$0]  %s125, 64, %s128, %s115
        $region20: #{tpu_custom_call.1} parent=15 // pred_fallthru
          _
      $region16: #{tpu_custom_call.1} parent=5 // pred_fallthru
        _
      %p131 = scmp.le.s32.totalorder 1, %s13
      %p132 = scmp.lt.s32.totalorder %s13, 3
      %p133 = pnand %p131, %p132
      %p134 = pneg %p133
      // Predicated region
      $region21: #{tpu_custom_call.1} parent=5 // pred_check
        _
      $region22: #{tpu_custom_call.1} parent=5 // pred_check_branch
        %136 = sbr.rel (%p133) target = $region24
      $region23: #{tpu_custom_call.1} parent=5 // pred_region
        %s137 = ssub.s32 %s13, 1
        %s138 = sand.u32 %s49, 1
        %s139 = scalar_lea.sflag [#allocation3], %s138
        %s140 = sand.u32 %s49, 1
        %s141 = smul.addr %s140, 4
        %s142 = scalar_lea.vmem [#allocation2], %s141
        // Predicated region
        $region25: #{tpu_custom_call.1} parent=23 // pred_check
          %p143 = pneg %p62
        $region26: #{tpu_custom_call.1} parent=23 // pred_check_branch
          %145 = sbr.rel (%p143) target = $region28
        $region27: #{tpu_custom_call.1} parent=23 // pred_region
          %146 = dma.done %s139, 64
        $region28: #{tpu_custom_call.1} parent=23 // pred_fallthru
          _
        %s147 = sand.u32 %s49, 1
        %s148 = scalar_lea.sflag [#allocation3], %s147
        %s149 = sand.u32 %s49, 1
        %s150 = smul.addr %s149, 4
        %s151 = scalar_lea.vmem [#allocation2], %s150
        %p152 = pneg %p62
        %p153 = pneg %p59
        %p154 = pneg %p92
        %p155 = pneg %p89
        %s156 = sand.u32 %s79, 1
        %s157 = scalar_lea.sflag [#allocation4], %s156
        %s158 = sand.u32 %s79, 1
        %s159 = smul.addr %s158, 4
        %s160 = scalar_lea.vmem [#allocation5], %s159
        %v161 = vld [vmem:[%s142] sm:$0xf]
        %v162 = vadd.f32 %v161, 1.0
        %vm163 = vcmask 125952
        %164 = vst.msk [vmem:[%s160] sm:$0xf] %vm163, %v162
        %s165 = sand.u32 %s79, 1
        %s166 = scalar_lea.sflag [#allocation4], %s165
        %s167 = sand.u32 %s79, 1
        %s168 = smul.addr %s167, 4
        %s169 = scalar_lea.vmem [#allocation5], %s168
        // Predicated region
        $region29: #{tpu_custom_call.1} parent=23 // pred_check
          %p170 = pneg %p89
        $region30: #{tpu_custom_call.1} parent=23 // pred_check_branch
          %172 = sbr.rel (%p170) target = $region32
        $region31: #{tpu_custom_call.1} parent=23 // pred_region
          %s174 = ssub.s32 64, 64
          %175 = vsyncadd %s166, %s174
          %s176 = sadd.s32 %s25, %s24
          %s177 = sadd.s32 %s176, %s23
          %s178 = smul.addr %s177, 64
          %s179 = scalar_lea.hbm %s1, %s178
          %s181 = sshll.u32 %s169, 4
          %s182 = int_to_ptr.vmem [resolvable:$true] %s181
          %184 = dma.vmem_to_hbm [thread:$0]  %s182, 64, %s179, %s166
        $region32: #{tpu_custom_call.1} parent=23 // pred_fallthru
          _
      $region24: #{tpu_custom_call.1} parent=5 // pred_fallthru
        _
      %p185 = scmp.le.s32.totalorder 2, %s13
      // Predicated region
      $region33: #{tpu_custom_call.1} parent=5 // pred_check
        %p186 = pneg %p185
      $region34: #{tpu_custom_call.1} parent=5 // pred_check_branch
        %188 = sbr.rel (%p186) target = $region36
      $region35: #{tpu_custom_call.1} parent=5 // pred_region
        %s189 = ssub.s32 %s13, 2
        // Predicated region
        $region37: #{tpu_custom_call.1} parent=35 // pred_check
          %p190 = pneg %p95
        $region38: #{tpu_custom_call.1} parent=35 // pred_check_branch
          %192 = sbr.rel (%p190) target = $region40
        $region39: #{tpu_custom_call.1} parent=35 // pred_region
          %s193 = sand.u32 %s80, 1
          %s194 = scalar_lea.sflag [#allocation4], %s193
          %s195 = sand.u32 %s80, 1
          %s196 = smul.addr %s195, 4
          %s197 = scalar_lea.vmem [#allocation5], %s196
          %198 = dma.done %s194, 64
        $region40: #{tpu_custom_call.1} parent=35 // pred_fallthru
          _
      $region36: #{tpu_custom_call.1} parent=5 // pred_fallthru
        _
    $region6: #{tpu_custom_call.1} parent=1 // loop_footer
      %s17 = sadd.s32 1, %s13
    $region7: #{tpu_custom_call.1} parent=1 // loop_footer_branch
      %12 = sbr.rel target = $region3
    $region8: #{tpu_custom_call.1} parent=1 // loop_exit
      _
    %199 = vsyncpa [#allocation3], 1
    %s200 = scalar_lea.sflag [#allocation3], 1
    %201 = vsyncpa %s200, 1
    %202 = vsyncpa [#allocation4], 1
    %s203 = scalar_lea.sflag [#allocation4], 1
    %204 = vsyncpa %s203, 1

</llo_original>
